<compile_context>
chip_gen: v6e
topology: v6e:2x2x1
jax: 0.10.0
libtpu: 0.0.40
codegen_flags: <defaults>
</compile_context>

<pallas_src>
import functools

import jax
import jax.numpy as jnp
import numpy as np
from jax.experimental import pallas as pl
from jax.experimental.pallas import tpu as pltpu


def code_completion_kernel(xw_ref, whh_ref, wfc_ref, bfc_ref, out_ref, hall_ref,
                           *, T, Bp):
    """Unrolled LSTM recurrence + batched output projection.

    xw_ref  : (T*Bp, 4H) f32   pre-computed  emb[idx] @ W_ih^T + (b_ih + b_hh)
    whh_ref : (H, 4H)    bf16  W_hh^T  (PyTorch gate order i, f, g, o)
    wfc_ref : (H, V)     bf16  fc.weight^T
    bfc_ref : (1, V)     f32   fc.bias
    out_ref : (T*Bp, V)  f32   logits, time-major, sublane/lane dense (64, 128)
    hall_ref: (T*Bp, H)  f32   VMEM scratch holding every step's hidden state
    """
    H = whh_ref.shape[0]

    # Same bf16 RHS reused by every unrolled step (MXU, f32 accumulation).
    # TODO(synk): at larger H/T, stage W_hh once via pltpu.matmul_push_rhs /
    # matmul_acc_lhs to avoid re-pushing the RHS on the serial critical path.
    whh = whh_ref[...]

    # ---- LSTM recurrence, statically unrolled (T is a compile-time constant).
    # Static unroll removes scf.for overhead on the serial critical path and
    # turns all xw / scratch accesses into static, 8-sublane-aligned slices.
    h = jnp.zeros((Bp, H), jnp.float32)
    c = jnp.zeros((Bp, H), jnp.float32)
    for t in range(T):
        gates = xw_ref[t * Bp:(t + 1) * Bp, :] + jnp.dot(
            h.astype(jnp.bfloat16), whh, preferred_element_type=jnp.float32)  # (Bp, 4H)
        # One full-vreg sigmoid + one full-vreg tanh (EUP), then lane slices.
        # Elementwise LSTM math stays in f32 (v5e has no bf16 VPU/EUP path).
        sig = jax.nn.sigmoid(gates)
        tg = jnp.tanh(gates)
        i = sig[:, 0 * H:1 * H]
        f = sig[:, 1 * H:2 * H]
        g = tg[:, 2 * H:3 * H]
        o = sig[:, 3 * H:4 * H]
        c = f * c + i * g
        h = o * jnp.tanh(c)
        hall_ref[t * Bp:(t + 1) * Bp, :] = h    # 8-sublane-aligned scratch write

    # ---- Output projection for all timesteps at once; dense (64, 128) store ----
    h_all = hall_ref[...].astype(jnp.bfloat16)                                # (TBp, H)
    out_ref[...] = (
        jnp.dot(h_all, wfc_ref[...], preferred_element_type=jnp.float32)
        + bfc_ref[...])


@jax.jit
def code_completion_forward(idx_bt, params):
    """idx_bt: (B, T) int32 -> logits (B, T, V) float32."""
    B, T = idx_bt.shape
    V, E = params["emb"].shape
    H = params["whh_t"].shape[0]
    H4 = 4 * H
    Bp = ((B + 7) // 8) * 8  # pad batch to a full sublane tile

    # Static weight fusion (outside the kernel, weights only), kept exact:
    #   embedding table @ W_ih^T + (b_ih + b_hh)  ->  (V, 4H)
    e2b = jnp.dot(params["emb"], params["wih_t"],
                  precision=jax.lax.Precision.HIGHEST) + params["b"]
    # bf16 operands for the MXU (f32 accumulation inside the kernel).
    whh_bf16 = params["whh_t"].astype(jnp.bfloat16)
    wfc_bf16 = params["wfc_t"].astype(jnp.bfloat16)

    # Time-major, batch padded to Bp sublanes (pad rows use token 0, sliced off),
    # then an XLA gather replaces the old in-kernel one-hot matmul: the kernel
    # only sees the (T*Bp, 4H) pre-activation slab, not the (V, 4H) table.
    idx_tb = jnp.zeros((T, Bp), jnp.int32).at[:, :B].set(idx_bt.T)
    xw = e2b[idx_tb.reshape(T * Bp)]                                          # (TBp, 4H)

    # NOTE: at realistic sizes (V in the thousands) the vocab axis should get its
    # own "parallel" grid dimension with 128-multiple lane tiles and an explicit
    # vmem_limit_bytes sized for v7x's 64 MiB VMEM; at this toy size one block
    # (and a single fused call) is optimal.
    out_flat = pl.pallas_call(
        functools.partial(code_completion_kernel, T=T, Bp=Bp),
        out_shape=jax.ShapeDtypeStruct((T * Bp, V), jnp.float32),
        grid=(1,),
        in_specs=[
            pl.BlockSpec((T * Bp, H4), lambda i: (0, 0)),
            pl.BlockSpec((H, H4), lambda i: (0, 0)),
            pl.BlockSpec((H, V), lambda i: (0, 0)),
            pl.BlockSpec((1, V), lambda i: (0, 0)),
        ],
        out_specs=pl.BlockSpec((T * Bp, V), lambda i: (0, 0)),
        scratch_shapes=[pltpu.VMEM((T * Bp, H), jnp.float32)],
        compiler_params=pltpu.CompilerParams(
            dimension_semantics=("arbitrary",)),
    )(xw, whh_bf16, wfc_bf16, params["bfc"])

    out_tbv = out_flat.reshape(T, Bp, V)[:, :B, :]   # drop batch padding
    return jnp.transpose(out_tbv, (1, 0, 2))         # back to batch_first (B, T, V)


def ref_forward(idx_bt, params):
    """Pure-JAX fp32 reference matching torch semantics (gate order i,f,g,o)."""
    emb = params["emb"][idx_bt]            # (B, T, E)
    x_tb = jnp.transpose(emb, (1, 0, 2))   # (T, B, E)
    H = params["whh_t"].shape[0]
    B = idx_bt.shape[0]

    def step(carry, x_t):
        h, c = carry
        gates = x_t @ params["wih_t"] + h @ params["whh_t"] + params["b"]
        i = jax.nn.sigmoid(gates[:, 0 * H:1 * H])
        f = jax.nn.sigmoid(gates[:, 1 * H:2 * H])
        g = jnp.tanh(gates[:, 2 * H:3 * H])
        o = jax.nn.sigmoid(gates[:, 3 * H:4 * H])
        c_new = f * c + i * g
        h_new = o * jnp.tanh(c_new)
        return (h_new, c_new), h_new

    init = (jnp.zeros((B, H), jnp.float32), jnp.zeros((B, H), jnp.float32))
    _, hs = jax.lax.scan(step, init, x_tb)          # (T, B, H)
    hs = jnp.transpose(hs, (1, 0, 2))               # (B, T, H)
    return hs @ params["wfc_t"] + params["bfc"]     # (B, T, V)


def init_params(key, vocab_size, embed_dim, hidden_dim):
    k = 1.0 / np.sqrt(hidden_dim)
    keys = jax.random.split(key, 7)
    emb = jax.random.normal(keys[0], (vocab_size, embed_dim), jnp.float32)
    w_ih = jax.random.uniform(keys[1], (4 * hidden_dim, embed_dim), jnp.float32, -k, k)
    w_hh = jax.random.uniform(keys[2], (4 * hidden_dim, hidden_dim), jnp.float32, -k, k)
    b_ih = jax.random.uniform(keys[3], (4 * hidden_dim,), jnp.float32, -k, k)
    b_hh = jax.random.uniform(keys[4], (4 * hidden_dim,), jnp.float32, -k, k)
    w_fc = jax.random.uniform(keys[5], (vocab_size, hidden_dim), jnp.float32, -k, k)
    b_fc = jax.random.uniform(keys[6], (vocab_size,), jnp.float32, -k, k)
    return {
        "emb": emb,
        "wih_t": w_ih.T,                          # (E, 4H)
        "whh_t": w_hh.T,                          # (H, 4H)
        "b": (b_ih + b_hh).reshape(1, -1),        # (1, 4H)
        "wfc_t": w_fc.T,                          # (H, V)
        "bfc": b_fc.reshape(1, -1),               # (1, V)
    }


if __name__ == "__main__":
    VOCAB, EMBED, HIDDEN = 128, 32, 32
    B, T = 2, 8

    key = jax.random.PRNGKey(0)
    pkey, ikey = jax.random.split(key)
    params = init_params(pkey, VOCAB, EMBED, HIDDEN)
    idx = jax.random.randint(ikey, (B, T), 0, VOCAB, dtype=jnp.int32)

    out = code_completion_forward(idx, params)
    out = jax.block_until_ready(out)

    ref = ref_forward(idx, params)
    assert out.shape == (B, T, VOCAB)
    # Tolerance loosened vs the fp32 reference because the recurrent (W_hh) and
    # FC matmuls use bf16 MXU operands (f32 accumulation); embedding/input-proj
    # path (HIGHEST-precision wrapper dot + exact gather) is effectively exact.
    np.testing.assert_allclose(np.asarray(out), np.asarray(ref), rtol=5e-2, atol=5e-2)

    print("KERNEL_OK")
</pallas_src>

<mosaic_0001>
module attributes {stable_mosaic.version = 11 : i64} {
  func.func @code_completion_kernel(%arg0: i32, %arg1: memref<64x128xf32, #tpu.memory_space<vmem>>, %arg2: memref<32x128xbf16, #tpu.memory_space<vmem>>, %arg3: memref<32x128xbf16, #tpu.memory_space<vmem>>, %arg4: memref<1x128xf32, #tpu.memory_space<vmem>>, %arg5: memref<64x128xf32, #tpu.memory_space<vmem>>, %arg6: memref<64x32xf32, #tpu.memory_space<vmem>>) attributes {dimension_semantics = [#tpu.dimension_semantics<arbitrary>], iteration_bounds = array<i64: 1>, scalar_prefetch = 0 : i64, scratch_operands = 1 : i64, tpu.core_type = #tpu.core_type<tc>, window_params = [{pipeline_mode = #tpu.pipeline_mode<synchronous>, transform_indices = @transform_0, window_bounds = array<i64: 64, 128>}, {pipeline_mode = #tpu.pipeline_mode<synchronous>, transform_indices = @transform_1, window_bounds = array<i64: 32, 128>}, {pipeline_mode = #tpu.pipeline_mode<synchronous>, transform_indices = @transform_2, window_bounds = array<i64: 32, 128>}, {pipeline_mode = #tpu.pipeline_mode<synchronous>, transform_indices = @transform_3, window_bounds = array<i64: 1, 128>}, {pipeline_mode = #tpu.pipeline_mode<synchronous>, transform_indices = @transform_4, window_bounds = array<i64: 64, 128>}]} {
    %c0 = arith.constant 0 : index
    %c0_0 = arith.constant 0 : index
    %0 = vector.load %arg2[%c0, %c0_0] : memref<32x128xbf16, #tpu.memory_space<vmem>>, vector<32x128xbf16>
    %cst = arith.constant 0.000000e+00 : f32
    %1 = vector.broadcast %cst : f32 to vector<8x32xf32>
    %cst_1 = arith.constant 0.000000e+00 : f32
    %2 = vector.broadcast %cst_1 : f32 to vector<8x32xf32>
    %c0_2 = arith.constant 0 : index
    %c0_3 = arith.constant 0 : index
    %3 = vector.load %arg1[%c0_2, %c0_3] : memref<64x128xf32, #tpu.memory_space<vmem>>, vector<8x128xf32>
    %4 = arith.truncf %1 : vector<8x32xf32> to vector<8x32xbf16>
    %cst_4 = arith.constant dense<0.000000e+00> : vector<8x128xf32>
    %5 = tpu.matmul %4, %0, %cst_4 {dimension_numbers = #tpu.dot_dimension_numbers<[1], [0], [0], [1], [0, 0, 1, 1], [], []>} : vector<8x32xbf16>, vector<32x128xbf16>, vector<8x128xf32> -> vector<8x128xf32>
    %6 = arith.addf %3, %5 : vector<8x128xf32>
    %7 = arith.negf %6 : vector<8x128xf32>
    %8 = math.exp %7 : vector<8x128xf32>
    %cst_5 = arith.constant 1.000000e+00 : f32
    %9 = vector.broadcast %cst_5 : f32 to vector<8x128xf32>
    %10 = arith.addf %9, %8 : vector<8x128xf32>
    %11 = arith.divf %9, %10 : vector<8x128xf32>
    %12 = math.tanh %6 : vector<8x128xf32>
    %13 = vector.extract_strided_slice %11 {offsets = [0, 0], sizes = [8, 32], strides = [1, 1]} : vector<8x128xf32> to vector<8x32xf32>
    %14 = vector.extract_strided_slice %11 {offsets = [0, 32], sizes = [8, 32], strides = [1, 1]} : vector<8x128xf32> to vector<8x32xf32>
    %15 = vector.extract_strided_slice %12 {offsets = [0, 64], sizes = [8, 32], strides = [1, 1]} : vector<8x128xf32> to vector<8x32xf32>
    %16 = vector.extract_strided_slice %11 {offsets = [0, 96], sizes = [8, 32], strides = [1, 1]} : vector<8x128xf32> to vector<8x32xf32>
    %17 = arith.mulf %14, %2 : vector<8x32xf32>
    %18 = arith.mulf %13, %15 : vector<8x32xf32>
    %19 = arith.addf %17, %18 : vector<8x32xf32>
    %20 = math.tanh %19 : vector<8x32xf32>
    %21 = arith.mulf %16, %20 : vector<8x32xf32>
    %c0_6 = arith.constant 0 : index
    %c0_7 = arith.constant 0 : index
    %22 = vector.load %arg6[%c0_6, %c0_7] : memref<64x32xf32, #tpu.memory_space<vmem>>, vector<8x32xf32>
    tpu.vector_store %arg6[%c0_6, %c0_7], %21 {strides = array<i32>} : memref<64x32xf32, #tpu.memory_space<vmem>>, vector<8x32xf32>,
    %c8 = arith.constant 8 : index
    %c0_8 = arith.constant 0 : index
    %23 = vector.load %arg1[%c8, %c0_8] : memref<64x128xf32, #tpu.memory_space<vmem>>, vector<8x128xf32>
    %24 = arith.truncf %21 : vector<8x32xf32> to vector<8x32xbf16>
    %cst_9 = arith.constant dense<0.000000e+00> : vector<8x128xf32>
    %25 = tpu.matmul %24, %0, %cst_9 {dimension_numbers = #tpu.dot_dimension_numbers<[1], [0], [0], [1], [0, 0, 1, 1], [], []>} : vector<8x32xbf16>, vector<32x128xbf16>, vector<8x128xf32> -> vector<8x128xf32>
    %26 = arith.addf %23, %25 : vector<8x128xf32>
    %27 = arith.negf %26 : vector<8x128xf32>
    %28 = math.exp %27 : vector<8x128xf32>
    %cst_10 = arith.constant 1.000000e+00 : f32
    %29 = vector.broadcast %cst_10 : f32 to vector<8x128xf32>
    %30 = arith.addf %29, %28 : vector<8x128xf32>
    %31 = arith.divf %29, %30 : vector<8x128xf32>
    %32 = math.tanh %26 : vector<8x128xf32>
    %33 = vector.extract_strided_slice %31 {offsets = [0, 0], sizes = [8, 32], strides = [1, 1]} : vector<8x128xf32> to vector<8x32xf32>
    %34 = vector.extract_strided_slice %31 {offsets = [0, 32], sizes = [8, 32], strides = [1, 1]} : vector<8x128xf32> to vector<8x32xf32>
    %35 = vector.extract_strided_slice %32 {offsets = [0, 64], sizes = [8, 32], strides = [1, 1]} : vector<8x128xf32> to vector<8x32xf32>
    %36 = vector.extract_strided_slice %31 {offsets = [0, 96], sizes = [8, 32], strides = [1, 1]} : vector<8x128xf32> to vector<8x32xf32>
    %37 = arith.mulf %34, %19 : vector<8x32xf32>
    %38 = arith.mulf %33, %35 : vector<8x32xf32>
    %39 = arith.addf %37, %38 : vector<8x32xf32>
    %40 = math.tanh %39 : vector<8x32xf32>
    %41 = arith.mulf %36, %40 : vector<8x32xf32>
    %c8_11 = arith.constant 8 : index
    %c0_12 = arith.constant 0 : index
    %42 = vector.load %arg6[%c8_11, %c0_12] : memref<64x32xf32, #tpu.memory_space<vmem>>, vector<8x32xf32>
    tpu.vector_store %arg6[%c8_11, %c0_12], %41 {strides = array<i32>} : memref<64x32xf32, #tpu.memory_space<vmem>>, vector<8x32xf32>,
    %c16 = arith.constant 16 : index
    %c0_13 = arith.constant 0 : index
    %43 = vector.load %arg1[%c16, %c0_13] : memref<64x128xf32, #tpu.memory_space<vmem>>, vector<8x128xf32>
    %44 = arith.truncf %41 : vector<8x32xf32> to vector<8x32xbf16>
    %cst_14 = arith.constant dense<0.000000e+00> : vector<8x128xf32>
    %45 = tpu.matmul %44, %0, %cst_14 {dimension_numbers = #tpu.dot_dimension_numbers<[1], [0], [0], [1], [0, 0, 1, 1], [], []>} : vector<8x32xbf16>, vector<32x128xbf16>, vector<8x128xf32> -> vector<8x128xf32>
    %46 = arith.addf %43, %45 : vector<8x128xf32>
    %47 = arith.negf %46 : vector<8x128xf32>
    %48 = math.exp %47 : vector<8x128xf32>
    %cst_15 = arith.constant 1.000000e+00 : f32
    %49 = vector.broadcast %cst_15 : f32 to vector<8x128xf32>
    %50 = arith.addf %49, %48 : vector<8x128xf32>
    %51 = arith.divf %49, %50 : vector<8x128xf32>
    %52 = math.tanh %46 : vector<8x128xf32>
    %53 = vector.extract_strided_slice %51 {offsets = [0, 0], sizes = [8, 32], strides = [1, 1]} : vector<8x128xf32> to vector<8x32xf32>
    %54 = vector.extract_strided_slice %51 {offsets = [0, 32], sizes = [8, 32], strides = [1, 1]} : vector<8x128xf32> to vector<8x32xf32>
    %55 = vector.extract_strided_slice %52 {offsets = [0, 64], sizes = [8, 32], strides = [1, 1]} : vector<8x128xf32> to vector<8x32xf32>
    %56 = vector.extract_strided_slice %51 {offsets = [0, 96], sizes = [8, 32], strides = [1, 1]} : vector<8x128xf32> to vector<8x32xf32>
    %57 = arith.mulf %54, %39 : vector<8x32xf32>
    %58 = arith.mulf %53, %55 : vector<8x32xf32>
    %59 = arith.addf %57, %58 : vector<8x32xf32>
    %60 = math.tanh %59 : vector<8x32xf32>
    %61 = arith.mulf %56, %60 : vector<8x32xf32>
    %c16_16 = arith.constant 16 : index
    %c0_17 = arith.constant 0 : index
    %62 = vector.load %arg6[%c16_16, %c0_17] : memref<64x32xf32, #tpu.memory_space<vmem>>, vector<8x32xf32>
    tpu.vector_store %arg6[%c16_16, %c0_17], %61 {strides = array<i32>} : memref<64x32xf32, #tpu.memory_space<vmem>>, vector<8x32xf32>,
    %c24 = arith.constant 24 : index
    %c0_18 = arith.constant 0 : index
    %63 = vector.load %arg1[%c24, %c0_18] : memref<64x128xf32, #tpu.memory_space<vmem>>, vector<8x128xf32>
    %64 = arith.truncf %61 : vector<8x32xf32> to vector<8x32xbf16>
    %cst_19 = arith.constant dense<0.000000e+00> : vector<8x128xf32>
    %65 = tpu.matmul %64, %0, %cst_19 {dimension_numbers = #tpu.dot_dimension_numbers<[1], [0], [0], [1], [0, 0, 1, 1], [], []>} : vector<8x32xbf16>, vector<32x128xbf16>, vector<8x128xf32> -> vector<8x128xf32>
    %66 = arith.addf %63, %65 : vector<8x128xf32>
    %67 = arith.negf %66 : vector<8x128xf32>
    %68 = math.exp %67 : vector<8x128xf32>
    %cst_20 = arith.constant 1.000000e+00 : f32
    %69 = vector.broadcast %cst_20 : f32 to vector<8x128xf32>
    %70 = arith.addf %69, %68 : vector<8x128xf32>
    %71 = arith.divf %69, %70 : vector<8x128xf32>
    %72 = math.tanh %66 : vector<8x128xf32>
    %73 = vector.extract_strided_slice %71 {offsets = [0, 0], sizes = [8, 32], strides = [1, 1]} : vector<8x128xf32> to vector<8x32xf32>
    %74 = vector.extract_strided_slice %71 {offsets = [0, 32], sizes = [8, 32], strides = [1, 1]} : vector<8x128xf32> to vector<8x32xf32>
    %75 = vector.extract_strided_slice %72 {offsets = [0, 64], sizes = [8, 32], strides = [1, 1]} : vector<8x128xf32> to vector<8x32xf32>
    %76 = vector.extract_strided_slice %71 {offsets = [0, 96], sizes = [8, 32], strides = [1, 1]} : vector<8x128xf32> to vector<8x32xf32>
    %77 = arith.mulf %74, %59 : vector<8x32xf32>
    %78 = arith.mulf %73, %75 : vector<8x32xf32>
    %79 = arith.addf %77, %78 : vector<8x32xf32>
    %80 = math.tanh %79 : vector<8x32xf32>
    %81 = arith.mulf %76, %80 : vector<8x32xf32>
    %c24_21 = arith.constant 24 : index
    %c0_22 = arith.constant 0 : index
    %82 = vector.load %arg6[%c24_21, %c0_22] : memref<64x32xf32, #tpu.memory_space<vmem>>, vector<8x32xf32>
    tpu.vector_store %arg6[%c24_21, %c0_22], %81 {strides = array<i32>} : memref<64x32xf32, #tpu.memory_space<vmem>>, vector<8x32xf32>,
    %c32 = arith.constant 32 : index
    %c0_23 = arith.constant 0 : index
    %83 = vector.load %arg1[%c32, %c0_23] : memref<64x128xf32, #tpu.memory_space<vmem>>, vector<8x128xf32>
    %84 = arith.truncf %81 : vector<8x32xf32> to vector<8x32xbf16>
    %cst_24 = arith.constant dense<0.000000e+00> : vector<8x128xf32>
    %85 = tpu.matmul %84, %0, %cst_24 {dimension_numbers = #tpu.dot_dimension_numbers<[1], [0], [0], [1], [0, 0, 1, 1], [], []>} : vector<8x32xbf16>, vector<32x128xbf16>, vector<8x128xf32> -> vector<8x128xf32>
    %86 = arith.addf %83, %85 : vector<8x128xf32>
    %87 = arith.negf %86 : vector<8x128xf32>
    %88 = math.exp %87 : vector<8x128xf32>
    %cst_25 = arith.constant 1.000000e+00 : f32
    %89 = vector.broadcast %cst_25 : f32 to vector<8x128xf32>
    %90 = arith.addf %89, %88 : vector<8x128xf32>
    %91 = arith.divf %89, %90 : vector<8x128xf32>
    %92 = math.tanh %86 : vector<8x128xf32>
    %93 = vector.extract_strided_slice %91 {offsets = [0, 0], sizes = [8, 32], strides = [1, 1]} : vector<8x128xf32> to vector<8x32xf32>
    %94 = vector.extract_strided_slice %91 {offsets = [0, 32], sizes = [8, 32], strides = [1, 1]} : vector<8x128xf32> to vector<8x32xf32>
    %95 = vector.extract_strided_slice %92 {offsets = [0, 64], sizes = [8, 32], strides = [1, 1]} : vector<8x128xf32> to vector<8x32xf32>
    %96 = vector.extract_strided_slice %91 {offsets = [0, 96], sizes = [8, 32], strides = [1, 1]} : vector<8x128xf32> to vector<8x32xf32>
    %97 = arith.mulf %94, %79 : vector<8x32xf32>
    %98 = arith.mulf %93, %95 : vector<8x32xf32>
    %99 = arith.addf %97, %98 : vector<8x32xf32>
    %100 = math.tanh %99 : vector<8x32xf32>
    %101 = arith.mulf %96, %100 : vector<8x32xf32>
    %c32_26 = arith.constant 32 : index
    %c0_27 = arith.constant 0 : index
    %102 = vector.load %arg6[%c32_26, %c0_27] : memref<64x32xf32, #tpu.memory_space<vmem>>, vector<8x32xf32>
    tpu.vector_store %arg6[%c32_26, %c0_27], %101 {strides = array<i32>} : memref<64x32xf32, #tpu.memory_space<vmem>>, vector<8x32xf32>,
    %c40 = arith.constant 40 : index
    %c0_28 = arith.constant 0 : index
    %103 = vector.load %arg1[%c40, %c0_28] : memref<64x128xf32, #tpu.memory_space<vmem>>, vector<8x128xf32>
    %104 = arith.truncf %101 : vector<8x32xf32> to vector<8x32xbf16>
    %cst_29 = arith.constant dense<0.000000e+00> : vector<8x128xf32>
    %105 = tpu.matmul %104, %0, %cst_29 {dimension_numbers = #tpu.dot_dimension_numbers<[1], [0], [0], [1], [0, 0, 1, 1], [], []>} : vector<8x32xbf16>, vector<32x128xbf16>, vector<8x128xf32> -> vector<8x128xf32>
    %106 = arith.addf %103, %105 : vector<8x128xf32>
    %107 = arith.negf %106 : vector<8x128xf32>
    %108 = math.exp %107 : vector<8x128xf32>
    %cst_30 = arith.constant 1.000000e+00 : f32
    %109 = vector.broadcast %cst_30 : f32 to vector<8x128xf32>
    %110 = arith.addf %109, %108 : vector<8x128xf32>
    %111 = arith.divf %109, %110 : vector<8x128xf32>
    %112 = math.tanh %106 : vector<8x128xf32>
    %113 = vector.extract_strided_slice %111 {offsets = [0, 0], sizes = [8, 32], strides = [1, 1]} : vector<8x128xf32> to vector<8x32xf32>
    %114 = vector.extract_strided_slice %111 {offsets = [0, 32], sizes = [8, 32], strides = [1, 1]} : vector<8x128xf32> to vector<8x32xf32>
    %115 = vector.extract_strided_slice %112 {offsets = [0, 64], sizes = [8, 32], strides = [1, 1]} : vector<8x128xf32> to vector<8x32xf32>
    %116 = vector.extract_strided_slice %111 {offsets = [0, 96], sizes = [8, 32], strides = [1, 1]} : vector<8x128xf32> to vector<8x32xf32>
    %117 = arith.mulf %114, %99 : vector<8x32xf32>
    %118 = arith.mulf %113, %115 : vector<8x32xf32>
    %119 = arith.addf %117, %118 : vector<8x32xf32>
    %120 = math.tanh %119 : vector<8x32xf32>
    %121 = arith.mulf %116, %120 : vector<8x32xf32>
    %c40_31 = arith.constant 40 : index
    %c0_32 = arith.constant 0 : index
    %122 = vector.load %arg6[%c40_31, %c0_32] : memref<64x32xf32, #tpu.memory_space<vmem>>, vector<8x32xf32>
    tpu.vector_store %arg6[%c40_31, %c0_32], %121 {strides = array<i32>} : memref<64x32xf32, #tpu.memory_space<vmem>>, vector<8x32xf32>,
    %c48 = arith.constant 48 : index
    %c0_33 = arith.constant 0 : index
    %123 = vector.load %arg1[%c48, %c0_33] : memref<64x128xf32, #tpu.memory_space<vmem>>, vector<8x128xf32>
    %124 = arith.truncf %121 : vector<8x32xf32> to vector<8x32xbf16>
    %cst_34 = arith.constant dense<0.000000e+00> : vector<8x128xf32>
    %125 = tpu.matmul %124, %0, %cst_34 {dimension_numbers = #tpu.dot_dimension_numbers<[1], [0], [0], [1], [0, 0, 1, 1], [], []>} : vector<8x32xbf16>, vector<32x128xbf16>, vector<8x128xf32> -> vector<8x128xf32>
    %126 = arith.addf %123, %125 : vector<8x128xf32>
    %127 = arith.negf %126 : vector<8x128xf32>
    %128 = math.exp %127 : vector<8x128xf32>
    %cst_35 = arith.constant 1.000000e+00 : f32
    %129 = vector.broadcast %cst_35 : f32 to vector<8x128xf32>
    %130 = arith.addf %129, %128 : vector<8x128xf32>
    %131 = arith.divf %129, %130 : vector<8x128xf32>
    %132 = math.tanh %126 : vector<8x128xf32>
    %133 = vector.extract_strided_slice %131 {offsets = [0, 0], sizes = [8, 32], strides = [1, 1]} : vector<8x128xf32> to vector<8x32xf32>
    %134 = vector.extract_strided_slice %131 {offsets = [0, 32], sizes = [8, 32], strides = [1, 1]} : vector<8x128xf32> to vector<8x32xf32>
    %135 = vector.extract_strided_slice %132 {offsets = [0, 64], sizes = [8, 32], strides = [1, 1]} : vector<8x128xf32> to vector<8x32xf32>
    %136 = vector.extract_strided_slice %131 {offsets = [0, 96], sizes = [8, 32], strides = [1, 1]} : vector<8x128xf32> to vector<8x32xf32>
    %137 = arith.mulf %134, %119 : vector<8x32xf32>
    %138 = arith.mulf %133, %135 : vector<8x32xf32>
    %139 = arith.addf %137, %138 : vector<8x32xf32>
    %140 = math.tanh %139 : vector<8x32xf32>
    %141 = arith.mulf %136, %140 : vector<8x32xf32>
    %c48_36 = arith.constant 48 : index
    %c0_37 = arith.constant 0 : index
    %142 = vector.load %arg6[%c48_36, %c0_37] : memref<64x32xf32, #tpu.memory_space<vmem>>, vector<8x32xf32>
    tpu.vector_store %arg6[%c48_36, %c0_37], %141 {strides = array<i32>} : memref<64x32xf32, #tpu.memory_space<vmem>>, vector<8x32xf32>,
    %c56 = arith.constant 56 : index
    %c0_38 = arith.constant 0 : index
    %143 = vector.load %arg1[%c56, %c0_38] : memref<64x128xf32, #tpu.memory_space<vmem>>, vector<8x128xf32>
    %144 = arith.truncf %141 : vector<8x32xf32> to vector<8x32xbf16>
    %cst_39 = arith.constant dense<0.000000e+00> : vector<8x128xf32>
    %145 = tpu.matmul %144, %0, %cst_39 {dimension_numbers = #tpu.dot_dimension_numbers<[1], [0], [0], [1], [0, 0, 1, 1], [], []>} : vector<8x32xbf16>, vector<32x128xbf16>, vector<8x128xf32> -> vector<8x128xf32>
    %146 = arith.addf %143, %145 : vector<8x128xf32>
    %147 = arith.negf %146 : vector<8x128xf32>
    %148 = math.exp %147 : vector<8x128xf32>
    %cst_40 = arith.constant 1.000000e+00 : f32
    %149 = vector.broadcast %cst_40 : f32 to vector<8x128xf32>
    %150 = arith.addf %149, %148 : vector<8x128xf32>
    %151 = arith.divf %149, %150 : vector<8x128xf32>
    %152 = math.tanh %146 : vector<8x128xf32>
    %153 = vector.extract_strided_slice %151 {offsets = [0, 0], sizes = [8, 32], strides = [1, 1]} : vector<8x128xf32> to vector<8x32xf32>
    %154 = vector.extract_strided_slice %151 {offsets = [0, 32], sizes = [8, 32], strides = [1, 1]} : vector<8x128xf32> to vector<8x32xf32>
    %155 = vector.extract_strided_slice %152 {offsets = [0, 64], sizes = [8, 32], strides = [1, 1]} : vector<8x128xf32> to vector<8x32xf32>
    %156 = vector.extract_strided_slice %151 {offsets = [0, 96], sizes = [8, 32], strides = [1, 1]} : vector<8x128xf32> to vector<8x32xf32>
    %157 = arith.mulf %154, %139 : vector<8x32xf32>
    %158 = arith.mulf %153, %155 : vector<8x32xf32>
    %159 = arith.addf %157, %158 : vector<8x32xf32>
    %160 = math.tanh %159 : vector<8x32xf32>
    %161 = arith.mulf %156, %160 : vector<8x32xf32>
    %c56_41 = arith.constant 56 : index
    %c0_42 = arith.constant 0 : index
    %162 = vector.load %arg6[%c56_41, %c0_42] : memref<64x32xf32, #tpu.memory_space<vmem>>, vector<8x32xf32>
    tpu.vector_store %arg6[%c56_41, %c0_42], %161 {strides = array<i32>} : memref<64x32xf32, #tpu.memory_space<vmem>>, vector<8x32xf32>,
    %c0_43 = arith.constant 0 : index
    %c0_44 = arith.constant 0 : index
    %163 = vector.load %arg6[%c0_43, %c0_44] : memref<64x32xf32, #tpu.memory_space<vmem>>, vector<64x32xf32>
    %164 = arith.truncf %163 : vector<64x32xf32> to vector<64x32xbf16>
    %c0_45 = arith.constant 0 : index
    %c0_46 = arith.constant 0 : index
    %165 = vector.load %arg3[%c0_45, %c0_46] : memref<32x128xbf16, #tpu.memory_space<vmem>>, vector<32x128xbf16>
    %cst_47 = arith.constant dense<0.000000e+00> : vector<64x128xf32>
    %166 = tpu.matmul %164, %165, %cst_47 {dimension_numbers = #tpu.dot_dimension_numbers<[1], [0], [0], [1], [0, 0, 1, 1], [], []>} : vector<64x32xbf16>, vector<32x128xbf16>, vector<64x128xf32> -> vector<64x128xf32>
    %c0_48 = arith.constant 0 : index
    %c0_49 = arith.constant 0 : index
    %167 = vector.load %arg4[%c0_48, %c0_49] : memref<1x128xf32, #tpu.memory_space<vmem>>, vector<1x128xf32>
    %168 = vector.broadcast %167 : vector<1x128xf32> to vector<64x128xf32>
    %169 = arith.addf %166, %168 : vector<64x128xf32>
    %c0_50 = arith.constant 0 : index
    %c0_51 = arith.constant 0 : index
    %170 = vector.load %arg5[%c0_50, %c0_51] : memref<64x128xf32, #tpu.memory_space<vmem>>, vector<64x128xf32>
    tpu.vector_store %arg5[%c0_50, %c0_51], %169 {strides = array<i32>} : memref<64x128xf32, #tpu.memory_space<vmem>>, vector<64x128xf32>,
    return
  }
  func.func @transform_0(%arg0: i32) -> (i32, i32) {
    %c0_i32 = arith.constant 0 : i32
    %c0_i32_0 = arith.constant 0 : i32
    %c0_i32_1 = arith.constant 0 : i32
    return %c0_i32, %c0_i32_0 : i32, i32
  }
  func.func @transform_1(%arg0: i32) -> (i32, i32) {
    %c0_i32 = arith.constant 0 : i32
    %c0_i32_0 = arith.constant 0 : i32
    %c0_i32_1 = arith.constant 0 : i32
    return %c0_i32, %c0_i32_0 : i32, i32
  }
  func.func @transform_2(%arg0: i32) -> (i32, i32) {
    %c0_i32 = arith.constant 0 : i32
    %c0_i32_0 = arith.constant 0 : i32
    %c0_i32_1 = arith.constant 0 : i32
    return %c0_i32, %c0_i32_0 : i32, i32
  }
  func.func @transform_3(%arg0: i32) -> (i32, i32) {
    %c0_i32 = arith.constant 0 : i32
    %c0_i32_0 = arith.constant 0 : i32
    %c0_i32_1 = arith.constant 0 : i32
    return %c0_i32, %c0_i32_0 : i32, i32
  }
  func.func @transform_4(%arg0: i32) -> (i32, i32) {
    %c0_i32 = arith.constant 0 : i32
    %c0_i32_0 = arith.constant 0 : i32
    %c0_i32_1 = arith.constant 0 : i32
    return %c0_i32, %c0_i32_0 : i32, i32
  }
}

</mosaic_0001>

<llo_original>
// kernel: code_completion_forward.1
$region0: #{code_completion_forward.1}
  #allocation0 [shape = 'u32[]', space=smem, size = 0x4, offset = 0x4, fixed_abs, tag = 'smem constant byte address 0x4 - core index']
  #allocation1 [shape = 'u32[144,128]{1,0:T(1,128)}', space=vmem, size = 0x12000, scoped, tag = 'internal scratch']
  #allocation2 [shape = 'f32[64,32]{1,0:T(8,128)}', space=vmem, size = 0x8000, scoped, tag = 'scratch operand']
  %s0 = inlined_call_operand.vmem [shape: f32[64,128], index: 0, kind: input, shape index: {}]
  %s1 = inlined_call_operand.vmem [shape: bf16[32,128], index: 1, kind: input, shape index: {}]
  %s2 = inlined_call_operand.vmem [shape: bf16[32,128], index: 2, kind: input, shape index: {}]
  %s3 = inlined_call_operand.vmem [shape: f32[1,128], index: 3, kind: input, shape index: {}]
  %s4 = inlined_call_operand.vmem [shape: f32[64,128], index: 4, kind: output, shape index: {}]
  %s5 = sld [smem:[#allocation0]]
  $region26: #{code_completion_forward.1} parent=0
    _
  %s7 = ssub.s32 1, %s5
  %s8 = scalar_select 0, %s7, %s5
  // Predicated region
  $region2: #{code_completion_forward.1} parent=0 // pred_check
    _
  $region3: #{code_completion_forward.1} parent=0 // pred_check_branch
    %10 = sbr.rel (0) target = $region5
  $region4: #{code_completion_forward.1} parent=0 // pred_region
    _
  $region5: #{code_completion_forward.1} parent=0 // pred_fallthru
    _
  // Predicated region
  $region6: #{code_completion_forward.1} parent=0 // pred_check
    _
  $region7: #{code_completion_forward.1} parent=0 // pred_check_branch
    %12 = sbr.rel (0) target = $region9
  $region8: #{code_completion_forward.1} parent=0 // pred_region
    _
  $region9: #{code_completion_forward.1} parent=0 // pred_fallthru
    _
  // Predicated region
  $region10: #{code_completion_forward.1} parent=0 // pred_check
    _
  $region11: #{code_completion_forward.1} parent=0 // pred_check_branch
    %14 = sbr.rel (0) target = $region13
  $region12: #{code_completion_forward.1} parent=0 // pred_region
    _
  $region13: #{code_completion_forward.1} parent=0 // pred_fallthru
    _
  // Predicated region
  $region14: #{code_completion_forward.1} parent=0 // pred_check
    _
  $region15: #{code_completion_forward.1} parent=0 // pred_check_branch
    %16 = sbr.rel (0) target = $region17
  $region16: #{code_completion_forward.1} parent=0 // pred_region
    _
  $region17: #{code_completion_forward.1} parent=0 // pred_fallthru
    _
  %v18 = vld [vmem:[%s1] sm:$0xf]
  %v19 = vld [vmem:[%s1 + $0x4] sm:$0xf]
  %v20 = vld [vmem:[%s1 + $0x8] sm:$0xf]
  %v21 = vld [vmem:[%s1 + $0xc] sm:$0xf]
  %v22 = vld [vmem:[%s0] sm:$0xff]
  %v27 = vunpack.c.l.b16 %v18
  %v28 = vunpack.c.l.b16 %v19
  %v29 = vunpack.c.l.b16 %v20
  %v30 = vunpack.c.l.b16 %v21
  %v31 = vpack.c.b16 %v28, %v27
  %v32 = vpack.c.b16 %v30, %v29
  %vm35 = vcmask 261120
  %v37 = vsel %vm35, 0, 0
  %39 = vmatprep.subr.bf16.mxu0 0
  %40 = vmatpush1.bf16.msra.mxu0 0
  %41 = vmatprep.subr.bf16.mxu0 0
  %42 = vmatpush1.bf16.msra.mxu0 0
  %43 = vmatprep.subr.bf16.mxu0 0
  %44 = vmatpush1.bf16.msra.mxu0 0
  %45 = vmatprep.subr.bf16.mxu0 0
  %46 = vmatpush1.bf16.msra.mxu0 0
  %47 = vmatprep.subr.bf16.mxu0 0
  %48 = vmatpush1.bf16.msra.mxu0 0
  %49 = vmatprep.subr.bf16.mxu0 0
  %50 = vmatpush1.bf16.msra.mxu0 0
  %51 = vmatprep.subr.bf16.mxu0 0
  %52 = vmatpush1.bf16.msra.mxu0 %v32
  %53 = vmatprep.subr.bf16.mxu0 0
  %54 = vmatpush1.bf16.msra.mxu0 %v31
  %55 = vmatprep.subr.bf16.mxu0 0
  %56 = vmatpush2.bf16.msra.mxu0 0
  %57 = vmatprep.subr.bf16.mxu0 0
  %58 = vmatpush2.bf16.msra.mxu0 0
  %59 = vmatprep.subr.bf16.mxu0 0
  %60 = vmatpush2.bf16.msra.mxu0 0
  %61 = vmatprep.subr.bf16.mxu0 0
  %62 = vmatpush2.bf16.msra.mxu0 0
  %63 = vmatprep.subr.bf16.mxu0 0
  %64 = vmatpush2.bf16.msra.mxu0 0
  %65 = vmatprep.subr.bf16.mxu0 0
  %66 = vmatpush2.bf16.msra.mxu0 0
  %67 = vmatprep.subr.bf16.mxu0 0
  %68 = vmatpush2.bf16.msra.mxu0 0
  %69 = vmatprep.subr.bf16.mxu0 0
  %70 = vmatpush2.bf16.msra.mxu0 0
  %71 = vmatprep.mubr.bf16.mxu0 0
  %72 = vmatmul.mubr.bf16.gmra.mxu0 %v37
  %v73 = vpop.f32.mrf.mxu0
  %v74 = vadd.f32 0.0, %v73
  %v75 = vpop.f32.mrf.mxu0
  %v76 = vpop.f32.mrf.mxu0
  %v77 = vpop.f32.mrf.mxu0
  %78 = vdwg.mxu0
  %v79 = vadd.f32 %v22, %v74
  %v80 = vxor.u32 %v79, 2147483648
  %v81 = vmul.f32 %v80, 1.442695
  %v82 = vpow.pop %v81
  %v83 = vadd.f32 %v82, 1.0
  %v84 = vrcp.pop %v83
  %v85 = vmul.f32 1.0, %v84
  %v86 = vtanh.pop %v79
  %v87 = vmul.f32 %v85, 0.0
  %89 = vrot.lane.b32.xlu0 %v86, 64
  %v90 = vpop.permute.xlu0 %89
  %v92 = vmul.f32 %v85, %v90
  %94 = vrot.lane.b32.xlu0 %v92, 32
  %v95 = vpop.permute.xlu0 %94
  %v97 = vadd.f32 %v87, %v95
  %v98 = vtanh.pop %v97
  %100 = vrot.lane.b32.xlu0 %v98, 64
  %v101 = vpop.permute.xlu0 %100
  %v103 = vmul.f32 %v85, %v101
  %105 = vrot.lane.b32.xlu0 %v103, 32
  %v106 = vpop.permute.xlu0 %105
  %108 = vst.msk [vmem:[#allocation2] sm:$0xff] %vm35, %v106
  %v109 = vld [vmem:[%s0 + $0x8] sm:$0xff]
  %v110 = vpack.c.bf16 %v103, %v103
  %112 = vrot.lane.b32.xlu0 %v110, 32
  %v113 = vpop.permute.xlu0 %112
  %v115 = vsel %vm35, %v113, 0
  %117 = vmatprep.subr.bf16.mxu0 0
  %118 = vmatpush1.bf16.msra.mxu0 0
  %119 = vmatprep.subr.bf16.mxu0 0
  %120 = vmatpush1.bf16.msra.mxu0 0
  %121 = vmatprep.subr.bf16.mxu0 0
  %122 = vmatpush1.bf16.msra.mxu0 0
  %123 = vmatprep.subr.bf16.mxu0 0
  %124 = vmatpush1.bf16.msra.mxu0 0
  %125 = vmatprep.subr.bf16.mxu0 0
  %126 = vmatpush1.bf16.msra.mxu0 0
  %127 = vmatprep.subr.bf16.mxu0 0
  %128 = vmatpush1.bf16.msra.mxu0 0
  %129 = vmatprep.subr.bf16.mxu0 0
  %130 = vmatpush1.bf16.msra.mxu0 %v32
  %131 = vmatprep.subr.bf16.mxu0 0
  %132 = vmatpush1.bf16.msra.mxu0 %v31
  %133 = vmatprep.subr.bf16.mxu0 0
  %134 = vmatpush2.bf16.msra.mxu0 0
  %135 = vmatprep.subr.bf16.mxu0 0
  %136 = vmatpush2.bf16.msra.mxu0 0
  %137 = vmatprep.subr.bf16.mxu0 0
  %138 = vmatpush2.bf16.msra.mxu0 0
  %139 = vmatprep.subr.bf16.mxu0 0
  %140 = vmatpush2.bf16.msra.mxu0 0
  %141 = vmatprep.subr.bf16.mxu0 0
  %142 = vmatpush2.bf16.msra.mxu0 0
  %143 = vmatprep.subr.bf16.mxu0 0
  %144 = vmatpush2.bf16.msra.mxu0 0
  %145 = vmatprep.subr.bf16.mxu0 0
  %146 = vmatpush2.bf16.msra.mxu0 0
  %147 = vmatprep.subr.bf16.mxu0 0
  %148 = vmatpush2.bf16.msra.mxu0 0
  %149 = vmatprep.mubr.bf16.mxu0 0
  %150 = vmatmul.mubr.bf16.gmra.mxu0 %v115
  %v151 = vpop.f32.mrf.mxu0
  %v152 = vadd.f32 0.0, %v151
  %v153 = vpop.f32.mrf.mxu0
  %v154 = vpop.f32.mrf.mxu0
  %v155 = vpop.f32.mrf.mxu0
  %156 = vdwg.mxu0
  %v157 = vadd.f32 %v109, %v152
  %v158 = vxor.u32 %v157, 2147483648
  %v159 = vmul.f32 %v158, 1.442695
  %v160 = vpow.pop %v159
  %v161 = vadd.f32 %v160, 1.0
  %v162 = vrcp.pop %v161
  %v163 = vmul.f32 1.0, %v162
  %v164 = vtanh.pop %v157
  %v165 = vmul.f32 %v163, %v97
  %167 = vrot.lane.b32.xlu0 %v164, 64
  %v168 = vpop.permute.xlu0 %167
  %v170 = vmul.f32 %v163, %v168
  %172 = vrot.lane.b32.xlu0 %v170, 32
  %v173 = vpop.permute.xlu0 %172
  %v175 = vadd.f32 %v165, %v173
  %v176 = vtanh.pop %v175
  %178 = vrot.lane.b32.xlu0 %v176, 64
  %v179 = vpop.permute.xlu0 %178
  %v181 = vmul.f32 %v163, %v179
  %183 = vrot.lane.b32.xlu0 %v181, 32
  %v184 = vpop.permute.xlu0 %183
  %186 = vst.msk [vmem:[#allocation2 + $0x8] sm:$0xff] %vm35, %v184
  %v187 = vld [vmem:[%s0 + $0x10] sm:$0xff]
  %v188 = vpack.c.bf16 %v181, %v181
  %190 = vrot.lane.b32.xlu0 %v188, 32
  %v191 = vpop.permute.xlu0 %190
  %v193 = vsel %vm35, %v191, 0
  %195 = vmatprep.subr.bf16.mxu0 0
  %196 = vmatpush1.bf16.msra.mxu0 0
  %197 = vmatprep.subr.bf16.mxu0 0
  %198 = vmatpush1.bf16.msra.mxu0 0
  %199 = vmatprep.subr.bf16.mxu0 0
  %200 = vmatpush1.bf16.msra.mxu0 0
  %201 = vmatprep.subr.bf16.mxu0 0
  %202 = vmatpush1.bf16.msra.mxu0 0
  %203 = vmatprep.subr.bf16.mxu0 0
  %204 = vmatpush1.bf16.msra.mxu0 0
  %205 = vmatprep.subr.bf16.mxu0 0
  %206 = vmatpush1.bf16.msra.mxu0 0
  %207 = vmatprep.subr.bf16.mxu0 0
  %208 = vmatpush1.bf16.msra.mxu0 %v32
  %209 = vmatprep.subr.bf16.mxu0 0
  %210 = vmatpush1.bf16.msra.mxu0 %v31
  %211 = vmatprep.subr.bf16.mxu0 0
  %212 = vmatpush2.bf16.msra.mxu0 0
  %213 = vmatprep.subr.bf16.mxu0 0
  %214 = vmatpush2.bf16.msra.mxu0 0
  %215 = vmatprep.subr.bf16.mxu0 0
  %216 = vmatpush2.bf16.msra.mxu0 0
  %217 = vmatprep.subr.bf16.mxu0 0
  %218 = vmatpush2.bf16.msra.mxu0 0
  %219 = vmatprep.subr.bf16.mxu0 0
  %220 = vmatpush2.bf16.msra.mxu0 0
  %221 = vmatprep.subr.bf16.mxu0 0
  %222 = vmatpush2.bf16.msra.mxu0 0
  %223 = vmatprep.subr.bf16.mxu0 0
  %224 = vmatpush2.bf16.msra.mxu0 0
  %225 = vmatprep.subr.bf16.mxu0 0
  %226 = vmatpush2.bf16.msra.mxu0 0
  %227 = vmatprep.mubr.bf16.mxu0 0
  %228 = vmatmul.mubr.bf16.gmra.mxu0 %v193
  %v229 = vpop.f32.mrf.mxu0
  %v230 = vadd.f32 0.0, %v229
  %v231 = vpop.f32.mrf.mxu0
  %v232 = vpop.f32.mrf.mxu0
  %v233 = vpop.f32.mrf.mxu0
  %234 = vdwg.mxu0
  %v235 = vadd.f32 %v187, %v230
  %v236 = vxor.u32 %v235, 2147483648
  %v237 = vmul.f32 %v236, 1.442695
  %v238 = vpow.pop %v237
  %v239 = vadd.f32 %v238, 1.0
  %v240 = vrcp.pop %v239
  %v241 = vmul.f32 1.0, %v240
  %v242 = vtanh.pop %v235
  %v243 = vmul.f32 %v241, %v175
  %245 = vrot.lane.b32.xlu0 %v242, 64
  %v246 = vpop.permute.xlu0 %245
  %v248 = vmul.f32 %v241, %v246
  %250 = vrot.lane.b32.xlu0 %v248, 32
  %v251 = vpop.permute.xlu0 %250
  %v253 = vadd.f32 %v243, %v251
  %v254 = vtanh.pop %v253
  %256 = vrot.lane.b32.xlu0 %v254, 64
  %v257 = vpop.permute.xlu0 %256
  %v259 = vmul.f32 %v241, %v257
  %261 = vrot.lane.b32.xlu0 %v259, 32
  %v262 = vpop.permute.xlu0 %261
  %264 = vst.msk [vmem:[#allocation2 + $0x10] sm:$0xff] %vm35, %v262
  %v265 = vld [vmem:[%s0 + $0x18] sm:$0xff]
  %v266 = vpack.c.bf16 %v259, %v259
  %268 = vrot.lane.b32.xlu0 %v266, 32
  %v269 = vpop.permute.xlu0 %268
  %v271 = vsel %vm35, %v269, 0
  %273 = vmatprep.subr.bf16.mxu0 0
  %274 = vmatpush1.bf16.msra.mxu0 0
  %275 = vmatprep.subr.bf16.mxu0 0
  %276 = vmatpush1.bf16.msra.mxu0 0
  %277 = vmatprep.subr.bf16.mxu0 0
  %278 = vmatpush1.bf16.msra.mxu0 0
  %279 = vmatprep.subr.bf16.mxu0 0
  %280 = vmatpush1.bf16.msra.mxu0 0
  %281 = vmatprep.subr.bf16.mxu0 0
  %282 = vmatpush1.bf16.msra.mxu0 0
  %283 = vmatprep.subr.bf16.mxu0 0
  %284 = vmatpush1.bf16.msra.mxu0 0
  %285 = vmatprep.subr.bf16.mxu0 0
  %286 = vmatpush1.bf16.msra.mxu0 %v32
  %287 = vmatprep.subr.bf16.mxu0 0
  %288 = vmatpush1.bf16.msra.mxu0 %v31
  %289 = vmatprep.subr.bf16.mxu0 0
  %290 = vmatpush2.bf16.msra.mxu0 0
  %291 = vmatprep.subr.bf16.mxu0 0
  %292 = vmatpush2.bf16.msra.mxu0 0
  %293 = vmatprep.subr.bf16.mxu0 0
  %294 = vmatpush2.bf16.msra.mxu0 0
  %295 = vmatprep.subr.bf16.mxu0 0
  %296 = vmatpush2.bf16.msra.mxu0 0
  %297 = vmatprep.subr.bf16.mxu0 0
  %298 = vmatpush2.bf16.msra.mxu0 0
  %299 = vmatprep.subr.bf16.mxu0 0
  %300 = vmatpush2.bf16.msra.mxu0 0
  %301 = vmatprep.subr.bf16.mxu0 0
  %302 = vmatpush2.bf16.msra.mxu0 0
  %303 = vmatprep.subr.bf16.mxu0 0
  %304 = vmatpush2.bf16.msra.mxu0 0
  %305 = vmatprep.mubr.bf16.mxu0 0
  %306 = vmatmul.mubr.bf16.gmra.mxu0 %v271
  %v307 = vpop.f32.mrf.mxu0
  %v308 = vadd.f32 0.0, %v307
  %v309 = vpop.f32.mrf.mxu0
  %v310 = vpop.f32.mrf.mxu0
  %v311 = vpop.f32.mrf.mxu0
  %312 = vdwg.mxu0
  %v313 = vadd.f32 %v265, %v308
  %v314 = vxor.u32 %v313, 2147483648
  %v315 = vmul.f32 %v314, 1.442695
  %v316 = vpow.pop %v315
  %v317 = vadd.f32 %v316, 1.0
  %v318 = vrcp.pop %v317
  %v319 = vmul.f32 1.0, %v318
  %v320 = vtanh.pop %v313
  %v321 = vmul.f32 %v319, %v253
  %323 = vrot.lane.b32.xlu0 %v320, 64
  %v324 = vpop.permute.xlu0 %323
  %v326 = vmul.f32 %v319, %v324
  %328 = vrot.lane.b32.xlu0 %v326, 32
  %v329 = vpop.permute.xlu0 %328
  %v331 = vadd.f32 %v321, %v329
  %v332 = vtanh.pop %v331
  %334 = vrot.lane.b32.xlu0 %v332, 64
  %v335 = vpop.permute.xlu0 %334
  %v337 = vmul.f32 %v319, %v335
  %339 = vrot.lane.b32.xlu0 %v337, 32
  %v340 = vpop.permute.xlu0 %339
  %342 = vst.msk [vmem:[#allocation2 + $0x18] sm:$0xff] %vm35, %v340
  %v343 = vld [vmem:[%s0 + $0x20] sm:$0xff]
  %v344 = vpack.c.bf16 %v337, %v337
  %346 = vrot.lane.b32.xlu0 %v344, 32
  %v347 = vpop.permute.xlu0 %346
  %v349 = vsel %vm35, %v347, 0
  %351 = vmatprep.subr.bf16.mxu0 0
  %352 = vmatpush1.bf16.msra.mxu0 0
  %353 = vmatprep.subr.bf16.mxu0 0
  %354 = vmatpush1.bf16.msra.mxu0 0
  %355 = vmatprep.subr.bf16.mxu0 0
  %356 = vmatpush1.bf16.msra.mxu0 0
  %357 = vmatprep.subr.bf16.mxu0 0
  %358 = vmatpush1.bf16.msra.mxu0 0
  %359 = vmatprep.subr.bf16.mxu0 0
  %360 = vmatpush1.bf16.msra.mxu0 0
  %361 = vmatprep.subr.bf16.mxu0 0
  %362 = vmatpush1.bf16.msra.mxu0 0
  %363 = vmatprep.subr.bf16.mxu0 0
  %364 = vmatpush1.bf16.msra.mxu0 %v32
  %365 = vmatprep.subr.bf16.mxu0 0
  %366 = vmatpush1.bf16.msra.mxu0 %v31
  %367 = vmatprep.subr.bf16.mxu0 0
  %368 = vmatpush2.bf16.msra.mxu0 0
  %369 = vmatprep.subr.bf16.mxu0 0
  %370 = vmatpush2.bf16.msra.mxu0 0
  %371 = vmatprep.subr.bf16.mxu0 0
  %372 = vmatpush2.bf16.msra.mxu0 0
  %373 = vmatprep.subr.bf16.mxu0 0
  %374 = vmatpush2.bf16.msra.mxu0 0
  %375 = vmatprep.subr.bf16.mxu0 0
  %376 = vmatpush2.bf16.msra.mxu0 0
  %377 = vmatprep.subr.bf16.mxu0 0
  %378 = vmatpush2.bf16.msra.mxu0 0
  %379 = vmatprep.subr.bf16.mxu0 0
  %380 = vmatpush2.bf16.msra.mxu0 0
  %381 = vmatprep.subr.bf16.mxu0 0
  %382 = vmatpush2.bf16.msra.mxu0 0
  %383 = vmatprep.mubr.bf16.mxu0 0
  %384 = vmatmul.mubr.bf16.gmra.mxu0 %v349
  %v385 = vpop.f32.mrf.mxu0
  %v386 = vadd.f32 0.0, %v385
  %v387 = vpop.f32.mrf.mxu0
  %v388 = vpop.f32.mrf.mxu0
  %v389 = vpop.f32.mrf.mxu0
  %390 = vdwg.mxu0
  %v391 = vadd.f32 %v343, %v386
  %v392 = vxor.u32 %v391, 2147483648
  %v393 = vmul.f32 %v392, 1.442695
  %v394 = vpow.pop %v393
  %v395 = vadd.f32 %v394, 1.0
  %v396 = vrcp.pop %v395
  %v397 = vmul.f32 1.0, %v396
  %v398 = vtanh.pop %v391
  %v399 = vmul.f32 %v397, %v331
  %401 = vrot.lane.b32.xlu0 %v398, 64
  %v402 = vpop.permute.xlu0 %401
  %v404 = vmul.f32 %v397, %v402
  %406 = vrot.lane.b32.xlu0 %v404, 32
  %v407 = vpop.permute.xlu0 %406
  %v409 = vadd.f32 %v399, %v407
  %v410 = vtanh.pop %v409
  %412 = vrot.lane.b32.xlu0 %v410, 64
  %v413 = vpop.permute.xlu0 %412
  %v415 = vmul.f32 %v397, %v413
  %417 = vrot.lane.b32.xlu0 %v415, 32
  %v418 = vpop.permute.xlu0 %417
  %420 = vst.msk [vmem:[#allocation2 + $0x20] sm:$0xff] %vm35, %v418
  %v421 = vld [vmem:[%s0 + $0x28] sm:$0xff]
  %v422 = vpack.c.bf16 %v415, %v415
  %424 = vrot.lane.b32.xlu0 %v422, 32
  %v425 = vpop.permute.xlu0 %424
  %v427 = vsel %vm35, %v425, 0
  %429 = vmatprep.subr.bf16.mxu0 0
  %430 = vmatpush1.bf16.msra.mxu0 0
  %431 = vmatprep.subr.bf16.mxu0 0
  %432 = vmatpush1.bf16.msra.mxu0 0
  %433 = vmatprep.subr.bf16.mxu0 0
  %434 = vmatpush1.bf16.msra.mxu0 0
  %435 = vmatprep.subr.bf16.mxu0 0
  %436 = vmatpush1.bf16.msra.mxu0 0
  %437 = vmatprep.subr.bf16.mxu0 0
  %438 = vmatpush1.bf16.msra.mxu0 0
  %439 = vmatprep.subr.bf16.mxu0 0
  %440 = vmatpush1.bf16.msra.mxu0 0
  %441 = vmatprep.subr.bf16.mxu0 0
  %442 = vmatpush1.bf16.msra.mxu0 %v32
  %443 = vmatprep.subr.bf16.mxu0 0
  %444 = vmatpush1.bf16.msra.mxu0 %v31
  %445 = vmatprep.subr.bf16.mxu0 0
  %446 = vmatpush2.bf16.msra.mxu0 0
  %447 = vmatprep.subr.bf16.mxu0 0
  %448 = vmatpush2.bf16.msra.mxu0 0
  %449 = vmatprep.subr.bf16.mxu0 0
  %450 = vmatpush2.bf16.msra.mxu0 0
  %451 = vmatprep.subr.bf16.mxu0 0
  %452 = vmatpush2.bf16.msra.mxu0 0
  %453 = vmatprep.subr.bf16.mxu0 0
  %454 = vmatpush2.bf16.msra.mxu0 0
  %455 = vmatprep.subr.bf16.mxu0 0
  %456 = vmatpush2.bf16.msra.mxu0 0
  %457 = vmatprep.subr.bf16.mxu0 0
  %458 = vmatpush2.bf16.msra.mxu0 0
  %459 = vmatprep.subr.bf16.mxu0 0
  %460 = vmatpush2.bf16.msra.mxu0 0
  %461 = vmatprep.mubr.bf16.mxu0 0
  %462 = vmatmul.mubr.bf16.gmra.mxu0 %v427
  %v463 = vpop.f32.mrf.mxu0
  %v464 = vadd.f32 0.0, %v463
  %v465 = vpop.f32.mrf.mxu0
  %v466 = vpop.f32.mrf.mxu0
  %v467 = vpop.f32.mrf.mxu0
  %468 = vdwg.mxu0
  %v469 = vadd.f32 %v421, %v464
  %v470 = vxor.u32 %v469, 2147483648
  %v471 = vmul.f32 %v470, 1.442695
  %v472 = vpow.pop %v471
  %v473 = vadd.f32 %v472, 1.0
  %v474 = vrcp.pop %v473
  %v475 = vmul.f32 1.0, %v474
  %v476 = vtanh.pop %v469
  %v477 = vmul.f32 %v475, %v409
  %479 = vrot.lane.b32.xlu0 %v476, 64
  %v480 = vpop.permute.xlu0 %479
  %v482 = vmul.f32 %v475, %v480
  %484 = vrot.lane.b32.xlu0 %v482, 32
  %v485 = vpop.permute.xlu0 %484
  %v487 = vadd.f32 %v477, %v485
  %v488 = vtanh.pop %v487
  %490 = vrot.lane.b32.xlu0 %v488, 64
  %v491 = vpop.permute.xlu0 %490
  %v493 = vmul.f32 %v475, %v491
  %495 = vrot.lane.b32.xlu0 %v493, 32
  %v496 = vpop.permute.xlu0 %495
  %498 = vst.msk [vmem:[#allocation2 + $0x28] sm:$0xff] %vm35, %v496
  %v499 = vld [vmem:[%s0 + $0x30] sm:$0xff]
  %v500 = vpack.c.bf16 %v493, %v493
  %502 = vrot.lane.b32.xlu0 %v500, 32
  %v503 = vpop.permute.xlu0 %502
  %v505 = vsel %vm35, %v503, 0
  %507 = vmatprep.subr.bf16.mxu0 0
  %508 = vmatpush1.bf16.msra.mxu0 0
  %509 = vmatprep.subr.bf16.mxu0 0
  %510 = vmatpush1.bf16.msra.mxu0 0
  %511 = vmatprep.subr.bf16.mxu0 0
  %512 = vmatpush1.bf16.msra.mxu0 0
  %513 = vmatprep.subr.bf16.mxu0 0
  %514 = vmatpush1.bf16.msra.mxu0 0
  %515 = vmatprep.subr.bf16.mxu0 0
  %516 = vmatpush1.bf16.msra.mxu0 0
  %517 = vmatprep.subr.bf16.mxu0 0
  %518 = vmatpush1.bf16.msra.mxu0 0
  %519 = vmatprep.subr.bf16.mxu0 0
  %520 = vmatpush1.bf16.msra.mxu0 %v32
  %521 = vmatprep.subr.bf16.mxu0 0
  %522 = vmatpush1.bf16.msra.mxu0 %v31
  %523 = vmatprep.subr.bf16.mxu0 0
  %524 = vmatpush2.bf16.msra.mxu0 0
  %525 = vmatprep.subr.bf16.mxu0 0
  %526 = vmatpush2.bf16.msra.mxu0 0
  %527 = vmatprep.subr.bf16.mxu0 0
  %528 = vmatpush2.bf16.msra.mxu0 0
  %529 = vmatprep.subr.bf16.mxu0 0
  %530 = vmatpush2.bf16.msra.mxu0 0
  %531 = vmatprep.subr.bf16.mxu0 0
  %532 = vmatpush2.bf16.msra.mxu0 0
  %533 = vmatprep.subr.bf16.mxu0 0
  %534 = vmatpush2.bf16.msra.mxu0 0
  %535 = vmatprep.subr.bf16.mxu0 0
  %536 = vmatpush2.bf16.msra.mxu0 0
  %537 = vmatprep.subr.bf16.mxu0 0
  %538 = vmatpush2.bf16.msra.mxu0 0
  %539 = vmatprep.mubr.bf16.mxu0 0
  %540 = vmatmul.mubr.bf16.gmra.mxu0 %v505
  %v541 = vpop.f32.mrf.mxu0
  %v542 = vadd.f32 0.0, %v541
  %v543 = vpop.f32.mrf.mxu0
  %v544 = vpop.f32.mrf.mxu0
  %v545 = vpop.f32.mrf.mxu0
  %546 = vdwg.mxu0
  %v547 = vadd.f32 %v499, %v542
  %v548 = vxor.u32 %v547, 2147483648
  %v549 = vmul.f32 %v548, 1.442695
  %v550 = vpow.pop %v549
  %v551 = vadd.f32 %v550, 1.0
  %v552 = vrcp.pop %v551
  %v553 = vmul.f32 1.0, %v552
  %v554 = vtanh.pop %v547
  %v555 = vmul.f32 %v553, %v487
  %557 = vrot.lane.b32.xlu0 %v554, 64
  %v558 = vpop.permute.xlu0 %557
  %v560 = vmul.f32 %v553, %v558
  %562 = vrot.lane.b32.xlu0 %v560, 32
  %v563 = vpop.permute.xlu0 %562
  %v565 = vadd.f32 %v555, %v563
  %v566 = vtanh.pop %v565
  %568 = vrot.lane.b32.xlu0 %v566, 64
  %v569 = vpop.permute.xlu0 %568
  %v571 = vmul.f32 %v553, %v569
  %573 = vrot.lane.b32.xlu0 %v571, 32
  %v574 = vpop.permute.xlu0 %573
  %576 = vst.msk [vmem:[#allocation2 + $0x30] sm:$0xff] %vm35, %v574
  %v577 = vld [vmem:[%s0 + $0x38] sm:$0xff]
  %v578 = vpack.c.bf16 %v571, %v571
  %580 = vrot.lane.b32.xlu0 %v578, 32
  %v581 = vpop.permute.xlu0 %580
  %v583 = vsel %vm35, %v581, 0
  %585 = vmatprep.subr.bf16.mxu0 0
  %586 = vmatpush1.bf16.msra.mxu0 0
  %587 = vmatprep.subr.bf16.mxu0 0
  %588 = vmatpush1.bf16.msra.mxu0 0
  %589 = vmatprep.subr.bf16.mxu0 0
  %590 = vmatpush1.bf16.msra.mxu0 0
  %591 = vmatprep.subr.bf16.mxu0 0
  %592 = vmatpush1.bf16.msra.mxu0 0
  %593 = vmatprep.subr.bf16.mxu0 0
  %594 = vmatpush1.bf16.msra.mxu0 0
  %595 = vmatprep.subr.bf16.mxu0 0
  %596 = vmatpush1.bf16.msra.mxu0 0
  %597 = vmatprep.subr.bf16.mxu0 0
  %598 = vmatpush1.bf16.msra.mxu0 %v32
  %599 = vmatprep.subr.bf16.mxu0 0
  %600 = vmatpush1.bf16.msra.mxu0 %v31
  %601 = vmatprep.subr.bf16.mxu0 0
  %602 = vmatpush2.bf16.msra.mxu0 0
  %603 = vmatprep.subr.bf16.mxu0 0
  %604 = vmatpush2.bf16.msra.mxu0 0
  %605 = vmatprep.subr.bf16.mxu0 0
  %606 = vmatpush2.bf16.msra.mxu0 0
  %607 = vmatprep.subr.bf16.mxu0 0
  %608 = vmatpush2.bf16.msra.mxu0 0
  %609 = vmatprep.subr.bf16.mxu0 0
  %610 = vmatpush2.bf16.msra.mxu0 0
  %611 = vmatprep.subr.bf16.mxu0 0
  %612 = vmatpush2.bf16.msra.mxu0 0
  %613 = vmatprep.subr.bf16.mxu0 0
  %614 = vmatpush2.bf16.msra.mxu0 0
  %615 = vmatprep.subr.bf16.mxu0 0
  %616 = vmatpush2.bf16.msra.mxu0 0
  %617 = vmatprep.mubr.bf16.mxu0 0
  %618 = vmatmul.mubr.bf16.gmra.mxu0 %v583
  %v619 = vpop.f32.mrf.mxu0
  %v620 = vadd.f32 0.0, %v619
  %v621 = vpop.f32.mrf.mxu0
  %v622 = vpop.f32.mrf.mxu0
  %v623 = vpop.f32.mrf.mxu0
  %624 = vdwg.mxu0
  %v625 = vadd.f32 %v577, %v620
  %v626 = vxor.u32 %v625, 2147483648
  %v627 = vmul.f32 %v626, 1.442695
  %v628 = vpow.pop %v627
  %v629 = vadd.f32 %v628, 1.0
  %v630 = vrcp.pop %v629
  %v631 = vmul.f32 1.0, %v630
  %v632 = vtanh.pop %v625
  %v633 = vmul.f32 %v631, %v565
  %635 = vrot.lane.b32.xlu0 %v632, 64
  %v636 = vpop.permute.xlu0 %635
  %v638 = vmul.f32 %v631, %v636
  %640 = vrot.lane.b32.xlu0 %v638, 32
  %v641 = vpop.permute.xlu0 %640
  %v643 = vadd.f32 %v633, %v641
  %v644 = vtanh.pop %v643
  %646 = vrot.lane.b32.xlu0 %v644, 64
  %v647 = vpop.permute.xlu0 %646
  %v649 = vmul.f32 %v631, %v647
  %651 = vrot.lane.b32.xlu0 %v649, 32
  %v652 = vpop.permute.xlu0 %651
  %654 = vst.msk [vmem:[#allocation2 + $0x38] sm:$0xff] %vm35, %v652
  %v655 = vld [vmem:[#allocation2] sm:$0xff]
  %v656 = vld [vmem:[#allocation2 + $0x8] sm:$0xff]
  %v657 = vld [vmem:[#allocation2 + $0x10] sm:$0xff]
  %v658 = vld [vmem:[#allocation2 + $0x18] sm:$0xff]
  %v659 = vld [vmem:[#allocation2 + $0x20] sm:$0xff]
  %v660 = vld [vmem:[#allocation2 + $0x28] sm:$0xff]
  %v661 = vld [vmem:[#allocation2 + $0x30] sm:$0xff]
  %v662 = vld [vmem:[#allocation2 + $0x38] sm:$0xff]
  %v663 = vpack.c.bf16 %v656, %v655
  %v664 = vpack.c.bf16 %v658, %v657
  %v665 = vpack.c.bf16 %v660, %v659
  %v666 = vpack.c.bf16 %v662, %v661
  %v667 = vld [vmem:[%s2] sm:$0xf]
  %v668 = vld [vmem:[%s2 + $0x4] sm:$0xf]
  %v669 = vld [vmem:[%s2 + $0x8] sm:$0xf]
  %v670 = vld [vmem:[%s2 + $0xc] sm:$0xf]
  %v671 = vld [vmem:[%s3] sm:$0x1]
  %v673 = vlaneseq
  %v674 = vshrl.u32 %v673, 7
  %v675 = vsub.s32 0, %v674
  %v676 = vrot.slane %v671, %v675
  %v682 = vunpack.c.l.b16 %v667
  %v683 = vunpack.c.l.b16 %v668
  %v684 = vunpack.c.l.b16 %v669
  %v685 = vunpack.c.l.b16 %v670
  %v686 = vpack.c.b16 %v683, %v682
  %v687 = vpack.c.b16 %v685, %v684
  %v691 = vsel %vm35, %v663, 0
  %v694 = vsel %vm35, %v664, 0
  %v697 = vsel %vm35, %v665, 0
  %v700 = vsel %vm35, %v666, 0
  %702 = vmatprep.subr.bf16.mxu0 0
  %703 = vmatpush1.bf16.msra.mxu0 0
  %704 = vmatprep.subr.bf16.mxu0 0
  %705 = vmatpush1.bf16.msra.mxu0 0
  %706 = vmatprep.subr.bf16.mxu0 0
  %707 = vmatpush1.bf16.msra.mxu0 0
  %708 = vmatprep.subr.bf16.mxu0 0
  %709 = vmatpush1.bf16.msra.mxu0 0
  %710 = vmatprep.subr.bf16.mxu0 0
  %711 = vmatpush1.bf16.msra.mxu0 0
  %712 = vmatprep.subr.bf16.mxu0 0
  %713 = vmatpush1.bf16.msra.mxu0 0
  %714 = vmatprep.subr.bf16.mxu0 0
  %715 = vmatpush1.bf16.msra.mxu0 %v687
  %716 = vmatprep.subr.bf16.mxu0 0
  %717 = vmatpush1.bf16.msra.mxu0 %v686
  %718 = vmatprep.subr.bf16.mxu0 0
  %719 = vmatpush2.bf16.msra.mxu0 0
  %720 = vmatprep.subr.bf16.mxu0 0
  %721 = vmatpush2.bf16.msra.mxu0 0
  %722 = vmatprep.subr.bf16.mxu0 0
  %723 = vmatpush2.bf16.msra.mxu0 0
  %724 = vmatprep.subr.bf16.mxu0 0
  %725 = vmatpush2.bf16.msra.mxu0 0
  %726 = vmatprep.subr.bf16.mxu0 0
  %727 = vmatpush2.bf16.msra.mxu0 0
  %728 = vmatprep.subr.bf16.mxu0 0
  %729 = vmatpush2.bf16.msra.mxu0 0
  %730 = vmatprep.subr.bf16.mxu0 0
  %731 = vmatpush2.bf16.msra.mxu0 0
  %732 = vmatprep.subr.bf16.mxu0 0
  %733 = vmatpush2.bf16.msra.mxu0 0
  %734 = vmatprep.mubr.bf16.mxu0 0
  %735 = vmatmul.mubr.bf16.gmra.mxu0 %v691
  %v736 = vpop.f32.mrf.mxu0
  %v737 = vadd.f32 %v676, %v736
  %v738 = vpop.f32.mrf.mxu0
  %v739 = vpop.f32.mrf.mxu0
  %v740 = vadd.f32 %v676, %v739
  %v741 = vpop.f32.mrf.mxu0
  %742 = vmatprep.mubr.bf16.mxu0 0
  %743 = vmatmul.mubr.bf16.gmra.mxu0 %v694
  %v744 = vpop.f32.mrf.mxu0
  %v745 = vadd.f32 %v676, %v744
  %v746 = vpop.f32.mrf.mxu0
  %v747 = vpop.f32.mrf.mxu0
  %v748 = vadd.f32 %v676, %v747
  %v749 = vpop.f32.mrf.mxu0
  %750 = vmatprep.mubr.bf16.mxu0 0
  %751 = vmatmul.mubr.bf16.gmra.mxu0 %v697
  %v752 = vpop.f32.mrf.mxu0
  %v753 = vadd.f32 %v676, %v752
  %v754 = vpop.f32.mrf.mxu0
  %v755 = vpop.f32.mrf.mxu0
  %v756 = vadd.f32 %v676, %v755
  %v757 = vpop.f32.mrf.mxu0
  %758 = vmatprep.mubr.bf16.mxu0 0
  %759 = vmatmul.mubr.bf16.gmra.mxu0 %v700
  %v760 = vpop.f32.mrf.mxu0
  %v761 = vadd.f32 %v676, %v760
  %v762 = vpop.f32.mrf.mxu0
  %v763 = vpop.f32.mrf.mxu0
  %v764 = vadd.f32 %v676, %v763
  %v765 = vpop.f32.mrf.mxu0
  %766 = vdwg.mxu0
  %767 = vst [vmem:[%s4] sm:$0xff] %v737
  %768 = vst [vmem:[%s4 + $0x8] sm:$0xff] %v740
  %769 = vst [vmem:[%s4 + $0x10] sm:$0xff] %v745
  %770 = vst [vmem:[%s4 + $0x18] sm:$0xff] %v748
  %771 = vst [vmem:[%s4 + $0x20] sm:$0xff] %v753
  %772 = vst [vmem:[%s4 + $0x28] sm:$0xff] %v756
  %773 = vst [vmem:[%s4 + $0x30] sm:$0xff] %v761
  %774 = vst [vmem:[%s4 + $0x38] sm:$0xff] %v764
  // Predicated region
  $region18: #{code_completion_forward.1} parent=0 // pred_check
    _
  $region19: #{code_completion_forward.1} parent=0 // pred_check_branch
    %776 = sbr.rel (0) target = $region21
  $region20: #{code_completion_forward.1} parent=0 // pred_region
    _
  $region21: #{code_completion_forward.1} parent=0 // pred_fallthru
    _
  // Predicated region
  $region22: #{code_completion_forward.1} parent=0 // pred_check
    _
  $region23: #{code_completion_forward.1} parent=0 // pred_check_branch
    %778 = sbr.rel (0) target = $region25
  $region24: #{code_completion_forward.1} parent=0 // pred_region
    _
  $region25: #{code_completion_forward.1} parent=0 // pred_fallthru
    _

</llo_original>
